<compile_context>
chip_gen: v6e
topology: v6e:2x2x1
jax: 0.10.0
libtpu: 0.0.40
codegen_flags: <defaults>
</compile_context>

<pallas_src>
import functools

import jax
import jax.numpy as jnp
from jax.experimental import pallas as pl
from jax.experimental.pallas import tpu as pltpu

LANE = 128  # padded feature width (lane axis)


# ----------------------------- Pallas kernel ------------------------------- #
def gcn_fused_kernel(adj_ref, x_ref, w_ref, b_ref, out_ref, h_ref, *, num_layers):
    """One grid step == one GCN layer; activations stay resident in VMEM scratch.

    adj_ref: (N, N)          bf16 normalized adjacency (resident across layers)
    x_ref:   (N, LANE)       bf16 zero-padded input features (resident)
    w_ref:   (1, LANE, LANE) bf16 this layer's zero-padded weight
    b_ref:   (1, 1, LANE)    f32  this layer's zero-padded bias
    out_ref: (N, LANE)       f32  final output (written on last layer only)
    h_ref:   (N, LANE)       bf16 VMEM scratch holding the current activation
    """
    layer = pl.program_id(0)

    @pl.when(layer == 0)
    def _():
        h_ref[...] = x_ref[...]

    cur = h_ref[...]                                               # (N, LANE) bf16
    # Feature transform first, then neighbor aggregation (both f32-accumulated on MXU).
    xw = jnp.dot(cur, w_ref[0], preferred_element_type=jnp.float32)
    h = jnp.dot(adj_ref[...], xw.astype(jnp.bfloat16),
                preferred_element_type=jnp.float32) + b_ref[0]

    @pl.when(layer < num_layers - 1)
    def _():
        h_ref[...] = jnp.maximum(h, 0.0).astype(jnp.bfloat16)

    @pl.when(layer == num_layers - 1)
    def _():
        out_ref[...] = h


# ------------------------------ glue (JAX) --------------------------------- #
def gcn_adj(edge_index, num_nodes):
    """Dense symmetric-normalized adjacency with self-loops (GCN_adj), in f32."""
    src, dst = edge_index[0], edge_index[1]
    a = jnp.zeros((num_nodes, num_nodes), jnp.float32)
    a = a.at[dst, src].set(1.0)
    a = a.at[src, dst].set(1.0)                                   # symmetrize
    a = jnp.maximum(a, jnp.eye(num_nodes, dtype=jnp.float32))     # add self loops
    deg = a.sum(axis=1)
    dinv = jax.lax.rsqrt(deg)                                     # keep norm in f32
    return a * dinv[:, None] * dinv[None, :]


def init_gcn_params(key, in_dim, hid_dim, out_dim, num_layers):
    dims = [in_dim] + [hid_dim] * (num_layers - 1) + [out_dim]
    params = []
    for li in range(num_layers):
        fin, fout = dims[li], dims[li + 1]
        key, wk, bk = jax.random.split(key, 3)
        limit = (6.0 / (fin + fout)) ** 0.5                       # glorot-uniform
        w = jax.random.uniform(wk, (fin, fout), jnp.float32, -limit, limit)
        b = 0.1 * jax.random.normal(bk, (fout,), jnp.float32)
        params.append((w, b))
    return params


def gcn_forward(x, edge_index, params):
    """Fused multi-layer GCN forward via a single pallas_call."""
    n, in_dim = x.shape
    num_layers = len(params)
    out_dim = params[-1][0].shape[1]
    assert n % 8 == 0, "N must be a multiple of 8 (sublane alignment)"
    assert in_dim <= LANE and out_dim <= LANE
    assert all(w.shape[0] <= LANE and w.shape[1] <= LANE for w, _ in params)

    adj = gcn_adj(edge_index, n).astype(jnp.bfloat16)

    # Zero-pad features / weights / bias to LANE so every matmul is lane-dense.
    x_p = jnp.zeros((n, LANE), jnp.bfloat16).at[:, :in_dim].set(x.astype(jnp.bfloat16))
    w_stack = jnp.zeros((num_layers, LANE, LANE), jnp.bfloat16)
    b_stack = jnp.zeros((num_layers, 1, LANE), jnp.float32)
    for li, (w, b) in enumerate(params):
        fin, fout = w.shape
        w_stack = w_stack.at[li, :fin, :fout].set(w.astype(jnp.bfloat16))
        b_stack = b_stack.at[li, 0, :fout].set(b.reshape(-1))

    out_p = pl.pallas_call(
        functools.partial(gcn_fused_kernel, num_layers=num_layers),
        out_shape=jax.ShapeDtypeStruct((n, LANE), jnp.float32),
        grid_spec=pltpu.PrefetchScalarGridSpec(
            num_scalar_prefetch=0,
            grid=(num_layers,),
            in_specs=[
                pl.BlockSpec((n, n), lambda l: (0, 0)),            # adj (resident)
                pl.BlockSpec((n, LANE), lambda l: (0, 0)),         # padded x (resident)
                pl.BlockSpec((1, LANE, LANE), lambda l: (l, 0, 0)),  # layer weight
                pl.BlockSpec((1, 1, LANE), lambda l: (l, 0, 0)),   # layer bias
            ],
            out_specs=pl.BlockSpec((n, LANE), lambda l: (0, 0)),   # resident output
            scratch_shapes=[pltpu.VMEM((n, LANE), jnp.bfloat16)],  # activations
        ),
        compiler_params=pltpu.CompilerParams(
            dimension_semantics=("arbitrary",),
            vmem_limit_bytes=32 * 1024 * 1024,
        ),
    )(adj, x_p, w_stack, b_stack)

    return out_p[:, :out_dim]


def gcn_reference(x, edge_index, params):
    """Pure-JAX f32 reference mirroring GCN.inference numpy math."""
    adj = gcn_adj(edge_index, x.shape[0])
    for i, (w, b) in enumerate(params):
        x = adj @ x @ w + b[None, :]
        if i < len(params) - 1:
            x = jnp.clip(x, 0.0, None)
    return x


# --------------------------------- main ------------------------------------ #
if __name__ == "__main__":
    N, E = 128, 512
    in_dim, hid_dim, out_dim, num_layers = 16, 32, 8, 3

    key = jax.random.PRNGKey(0)
    kx, ke, kp = jax.random.split(key, 3)
    x = jax.random.normal(kx, (N, in_dim), jnp.float32)
    edge_index = jax.random.randint(ke, (2, E), 0, N, jnp.int32)
    params = init_gcn_params(kp, in_dim, hid_dim, out_dim, num_layers)

    out = gcn_forward(x, edge_index, params)
    out = jax.block_until_ready(out)

    ref = gcn_reference(x, edge_index, params)
    assert out.shape == (N, out_dim)
    # bf16 MXU inputs with f32 accumulation -> relaxed tolerance vs. f32 reference.
    assert jnp.allclose(out, ref, atol=3e-2, rtol=3e-2), float(jnp.max(jnp.abs(out - ref)))

    print("KERNEL_OK")
</pallas_src>

<mosaic_0001>
module attributes {stable_mosaic.version = 11 : i64} {
  func.func @gcn_fused_kernel(%arg0: i32, %arg1: memref<128x128xbf16, #tpu.memory_space<vmem>>, %arg2: memref<128x128xbf16, #tpu.memory_space<vmem>>, %arg3: memref<1x128x128xbf16, #tpu.memory_space<vmem>>, %arg4: memref<1x1x128xf32, #tpu.memory_space<vmem>>, %arg5: memref<128x128xf32, #tpu.memory_space<vmem>>, %arg6: memref<128x128xbf16, #tpu.memory_space<vmem>>) attributes {dimension_semantics = [#tpu.dimension_semantics<arbitrary>], iteration_bounds = array<i64: 3>, scalar_prefetch = 0 : i64, scratch_operands = 1 : i64, tpu.core_type = #tpu.core_type<tc>, window_params = [{pipeline_mode = #tpu.pipeline_mode<synchronous>, transform_indices = @transform_0, window_bounds = array<i64: 128, 128>}, {pipeline_mode = #tpu.pipeline_mode<synchronous>, transform_indices = @transform_1, window_bounds = array<i64: 128, 128>}, {transform_indices = @transform_2, window_bounds = array<i64: 1, 128, 128>}, {transform_indices = @transform_3, window_bounds = array<i64: 1, 1, 128>}, {pipeline_mode = #tpu.pipeline_mode<synchronous>, transform_indices = @transform_4, window_bounds = array<i64: 128, 128>}]} {
    %c0_i32 = arith.constant 0 : i32
    %0 = arith.cmpi eq, %arg0, %c0_i32 : i32
    %1 = arith.extui %0 : i1 to i32
    %c0_i32_0 = arith.constant 0 : i32
    %2 = arith.cmpi ne, %1, %c0_i32_0 : i32
    scf.if %2 {
      %c0_14 = arith.constant 0 : index
      %c0_15 = arith.constant 0 : index
      %20 = vector.load %arg2[%c0_14, %c0_15] : memref<128x128xbf16, #tpu.memory_space<vmem>>, vector<128x128xbf16>
      %c0_16 = arith.constant 0 : index
      %c0_17 = arith.constant 0 : index
      %21 = vector.load %arg6[%c0_16, %c0_17] : memref<128x128xbf16, #tpu.memory_space<vmem>>, vector<128x128xbf16>
      tpu.vector_store %arg6[%c0_16, %c0_17], %20 {strides = array<i32>} : memref<128x128xbf16, #tpu.memory_space<vmem>>, vector<128x128xbf16>,
    } else {
    }
    %c0 = arith.constant 0 : index
    %c0_1 = arith.constant 0 : index
    %3 = vector.load %arg6[%c0, %c0_1] : memref<128x128xbf16, #tpu.memory_space<vmem>>, vector<128x128xbf16>
    %c0_2 = arith.constant 0 : index
    %c0_3 = arith.constant 0 : index
    %c0_4 = arith.constant 0 : index
    %4 = vector.load %arg3[%c0_2, %c0_3, %c0_4] : memref<1x128x128xbf16, #tpu.memory_space<vmem>>, vector<1x128x128xbf16>
    %5 = vector.shape_cast %4 : vector<1x128x128xbf16> to vector<128x128xbf16>
    %cst = arith.constant dense<0.000000e+00> : vector<128x128xf32>
    %6 = tpu.matmul %3, %5, %cst {dimension_numbers = #tpu.dot_dimension_numbers<[1], [0], [0], [1], [0, 0, 1, 1], [], []>} : vector<128x128xbf16>, vector<128x128xbf16>, vector<128x128xf32> -> vector<128x128xf32>
    %c0_5 = arith.constant 0 : index
    %c0_6 = arith.constant 0 : index
    %7 = vector.load %arg1[%c0_5, %c0_6] : memref<128x128xbf16, #tpu.memory_space<vmem>>, vector<128x128xbf16>
    %8 = arith.truncf %6 : vector<128x128xf32> to vector<128x128xbf16>
    %cst_7 = arith.constant dense<0.000000e+00> : vector<128x128xf32>
    %9 = tpu.matmul %7, %8, %cst_7 {dimension_numbers = #tpu.dot_dimension_numbers<[1], [0], [0], [1], [0, 0, 1, 1], [], []>} : vector<128x128xbf16>, vector<128x128xbf16>, vector<128x128xf32> -> vector<128x128xf32>
    %c0_8 = arith.constant 0 : index
    %c0_9 = arith.constant 0 : index
    %c0_10 = arith.constant 0 : index
    %10 = vector.load %arg4[%c0_8, %c0_9, %c0_10] : memref<1x1x128xf32, #tpu.memory_space<vmem>>, vector<1x1x128xf32>
    %11 = vector.shape_cast %10 : vector<1x1x128xf32> to vector<1x128xf32>
    %12 = vector.broadcast %11 : vector<1x128xf32> to vector<128x128xf32>
    %13 = arith.addf %9, %12 : vector<128x128xf32>
    %c2_i32 = arith.constant 2 : i32
    %14 = arith.cmpi slt, %arg0, %c2_i32 : i32
    %15 = arith.extui %14 : i1 to i32
    %c0_i32_11 = arith.constant 0 : i32
    %16 = arith.cmpi ne, %15, %c0_i32_11 : i32
    scf.if %16 {
      %cst_14 = arith.constant 0.000000e+00 : f32
      %20 = vector.broadcast %cst_14 : f32 to vector<128x128xf32>
      %21 = arith.maximumf %13, %20 : vector<128x128xf32>
      %22 = arith.truncf %21 : vector<128x128xf32> to vector<128x128xbf16>
      %c0_15 = arith.constant 0 : index
      %c0_16 = arith.constant 0 : index
      %23 = vector.load %arg6[%c0_15, %c0_16] : memref<128x128xbf16, #tpu.memory_space<vmem>>, vector<128x128xbf16>
      tpu.vector_store %arg6[%c0_15, %c0_16], %22 {strides = array<i32>} : memref<128x128xbf16, #tpu.memory_space<vmem>>, vector<128x128xbf16>,
    } else {
    }
    %c2_i32_12 = arith.constant 2 : i32
    %17 = arith.cmpi eq, %arg0, %c2_i32_12 : i32
    %18 = arith.extui %17 : i1 to i32
    %c0_i32_13 = arith.constant 0 : i32
    %19 = arith.cmpi ne, %18, %c0_i32_13 : i32
    scf.if %19 {
      %c0_14 = arith.constant 0 : index
      %c0_15 = arith.constant 0 : index
      %20 = vector.load %arg5[%c0_14, %c0_15] : memref<128x128xf32, #tpu.memory_space<vmem>>, vector<128x128xf32>
      tpu.vector_store %arg5[%c0_14, %c0_15], %13 {strides = array<i32>} : memref<128x128xf32, #tpu.memory_space<vmem>>, vector<128x128xf32>,
    } else {
    }
    return
  }
  func.func @transform_0(%arg0: i32) -> (i32, i32) {
    %c0_i32 = arith.constant 0 : i32
    %c0_i32_0 = arith.constant 0 : i32
    %c0_i32_1 = arith.constant 0 : i32
    return %c0_i32, %c0_i32_0 : i32, i32
  }
  func.func @transform_1(%arg0: i32) -> (i32, i32) {
    %c0_i32 = arith.constant 0 : i32
    %c0_i32_0 = arith.constant 0 : i32
    %c0_i32_1 = arith.constant 0 : i32
    return %c0_i32, %c0_i32_0 : i32, i32
  }
  func.func @transform_2(%arg0: i32) -> (i32, i32, i32) {
    %c0_i32 = arith.constant 0 : i32
    %c0_i32_0 = arith.constant 0 : i32
    %c0_i32_1 = arith.constant 0 : i32
    return %arg0, %c0_i32, %c0_i32_0 : i32, i32, i32
  }
  func.func @transform_3(%arg0: i32) -> (i32, i32, i32) {
    %c0_i32 = arith.constant 0 : i32
    %c0_i32_0 = arith.constant 0 : i32
    %c0_i32_1 = arith.constant 0 : i32
    return %arg0, %c0_i32, %c0_i32_0 : i32, i32, i32
  }
  func.func @transform_4(%arg0: i32) -> (i32, i32) {
    %c0_i32 = arith.constant 0 : i32
    %c0_i32_0 = arith.constant 0 : i32
    %c0_i32_1 = arith.constant 0 : i32
    return %c0_i32, %c0_i32_0 : i32, i32
  }
}

</mosaic_0001>

<llo_original>
// kernel: tpu_custom_call.1
$region0: #{tpu_custom_call.1}
  #allocation0 [shape = 'u32[]', space=smem, size = 0x4, offset = 0x4, fixed_abs, tag = 'smem constant byte address 0x4 - core index']
  #allocation1 [shape = 'u32[144,128]{1,0:T(1,128)}', space=vmem, size = 0x12000, scoped, tag = 'internal scratch']
  #allocation2 [shape = 'bf16[128,128]{1,0:T(8,128)(2,1)}', space=vmem, size = 0x8000, scoped, tag = 'scratch operand']
  %s0 = inlined_call_operand.hbm [shape: bf16[128,128], index: 0, kind: input, shape index: {}]
  %s1 = inlined_call_operand.hbm [shape: bf16[128,128], index: 1, kind: input, shape index: {}]
  %s2 = inlined_call_operand.hbm [shape: bf16[3,128,128], index: 2, kind: input, shape index: {}]
  %s3 = inlined_call_operand.vmem [shape: f32[3,1,128], index: 3, kind: input, shape index: {}]
  %s4 = inlined_call_operand.hbm [shape: f32[128,128], index: 4, kind: output, shape index: {}]
  %s5 = sld [smem:[#allocation0]]
  $region73: #{tpu_custom_call.1} parent=0
    _
  %s7 = ssub.s32 1, %s5
  %s8 = scalar_select 0, %s7, %s5
  $region1: #{tpu_custom_call.1} parent=0
    #allocation3 [shape = 'u8[32768]{0}', space=vmem, size = 0x8000, scoped, tag = 'input window, operand 0, single buffered']
    #allocation4 [shape = 's32[2]{0}', space=sflag, size = 0x8, scoped, tag = 'scoped memory for tpu_custom_call.1']
    #allocation5 [shape = 's32[2]{0}', space=sflag, size = 0x8, scoped, tag = 'scoped memory for tpu_custom_call.1']
    #allocation6 [shape = 'u8[32768]{0}', space=vmem, size = 0x8000, scoped, tag = 'input window, operand 1, single buffered']
    #allocation7 [shape = 's32[1]{0}', space=sflag, size = 0x4, scoped, tag = 'scoped memory for tpu_custom_call.1']
    #allocation8 [shape = 'u8[65536]{0}', space=vmem, size = 0x10000, scoped, tag = 'input window, operand 2']
    #allocation9 [shape = 'u8[65536]{0}', space=vmem, size = 0x10000, scoped, tag = 'output window, operand 0, single buffered']
    %9 = vsyncpa [#allocation4], 0
    %10 = vsyncpa [#allocation7], 0
    %11 = vsyncpa [#allocation5], 0
    loop: start=0, step=1, limit=5
    $region2: #{tpu_custom_call.1} parent=1 // loop_pre_header
      _
    $region3: #{tpu_custom_call.1} parent=1 // loop_header
      %s13 = sphi 0, %s17
      %p14 = scmp.ge.s32.totalorder %s13, 5
      %s21 = sphi 0, %s21
      %s23 = sphi 0, %s21
      %s24 = sphi 0, %s23
      %s38 = sphi 0, %s24
      %s42 = sphi 0, %s42
      %s44 = sphi 0, %s42
      %s45 = sphi 0, %s44
      %s59 = sphi 0, %s45
      %s65 = sphi 0, %s67
      %s68 = sphi 0, %s65
      %s69 = sphi 0, %s68
      %s85 = sphi 0, %s69
      %s91 = sphi 0, %s93
      %s94 = sphi 0, %s91
      %s95 = sphi 0, %s94
      %s111 = sphi 0, %s95
      %s115 = sphi 0, %s115
      %s117 = sphi 0, %s115
      %s118 = sphi 0, %s117
      %s132 = sphi 0, %s118
    $region4: #{tpu_custom_call.1} parent=1 // loop_header_branch
      %16 = sbr.rel (%p14) target = $region8
    $region5: #{tpu_custom_call.1} parent=1 // loop_body
      %s18 = ssub.s32 %s13, 1
      %s19 = ssub.s32 %s13, 2
      %s20 = sadd.s32 %s13, 1
      %s22 = sadd.s32 %s21, 1
      %p25 = scmp.eq.s32.totalorder %s13, 2
      %p26 = scmp.ne.s32.totalorder %s21, %s23
      %p27 = scmp.eq.s32.totalorder %s13, 0
      %p28 = por %p26, %p27
      %p29 = scmp.ne.s32.totalorder %s21, %s23
      %p30 = scmp.eq.s32.totalorder %s18, 2
      %p31 = por %p29, %p30
      %p32 = scmp.ne.s32.totalorder %s23, %s24
      %p33 = scmp.eq.s32.totalorder %s18, 0
      %p34 = por %p32, %p33
      %p35 = scmp.ne.s32.totalorder %s23, %s24
      %p36 = scmp.eq.s32.totalorder %s19, 2
      %p37 = por %p35, %p36
      %p39 = scmp.ne.s32.totalorder %s24, %s38
      %p40 = scmp.eq.s32.totalorder %s19, 0
      %p41 = por %p39, %p40
      %s43 = sadd.s32 %s42, 1
      %p46 = scmp.eq.s32.totalorder %s13, 2
      %p47 = scmp.ne.s32.totalorder %s42, %s44
      %p48 = scmp.eq.s32.totalorder %s13, 0
      %p49 = por %p47, %p48
      %p50 = scmp.ne.s32.totalorder %s42, %s44
      %p51 = scmp.eq.s32.totalorder %s18, 2
      %p52 = por %p50, %p51
      %p53 = scmp.ne.s32.totalorder %s44, %s45
      %p54 = scmp.eq.s32.totalorder %s18, 0
      %p55 = por %p53, %p54
      %p56 = scmp.ne.s32.totalorder %s44, %s45
      %p57 = scmp.eq.s32.totalorder %s19, 2
      %p58 = por %p56, %p57
      %p60 = scmp.ne.s32.totalorder %s45, %s59
      %p61 = scmp.eq.s32.totalorder %s19, 0
      %p62 = por %p60, %p61
      %s63 = ssub.s32 %s13, %s20
      %p64 = scmp.eq.s32.totalorder %s63, 0
      %s66 = sadd.s32 %s65, 1
      %s67 = scalar_select %p64, %s65, %s66
      %p70 = pneg %p64
      %p71 = scmp.eq.s32.totalorder %s13, 2
      %p72 = por %p70, %p71
      %p73 = scmp.ne.s32.totalorder %s65, %s68
      %p74 = scmp.eq.s32.totalorder %s13, 0
      %p75 = por %p73, %p74
      %p76 = scmp.ne.s32.totalorder %s65, %s68
      %p77 = scmp.eq.s32.totalorder %s18, 2
      %p78 = por %p76, %p77
      %p79 = scmp.ne.s32.totalorder %s68, %s69
      %p80 = scmp.eq.s32.totalorder %s18, 0
      %p81 = por %p79, %p80
      %p82 = scmp.ne.s32.totalorder %s68, %s69
      %p83 = scmp.eq.s32.totalorder %s19, 2
      %p84 = por %p82, %p83
      %p86 = scmp.ne.s32.totalorder %s69, %s85
      %p87 = scmp.eq.s32.totalorder %s19, 0
      %p88 = por %p86, %p87
      %s89 = ssub.s32 %s13, %s20
      %p90 = scmp.eq.s32.totalorder %s89, 0
      %s92 = sadd.s32 %s91, 1
      %s93 = scalar_select %p90, %s91, %s92
      %p96 = pneg %p90
      %p97 = scmp.eq.s32.totalorder %s13, 2
      %p98 = por %p96, %p97
      %p99 = scmp.ne.s32.totalorder %s91, %s94
      %p100 = scmp.eq.s32.totalorder %s13, 0
      %p101 = por %p99, %p100
      %p102 = scmp.ne.s32.totalorder %s91, %s94
      %p103 = scmp.eq.s32.totalorder %s18, 2
      %p104 = por %p102, %p103
      %p105 = scmp.ne.s32.totalorder %s94, %s95
      %p106 = scmp.eq.s32.totalorder %s18, 0
      %p107 = por %p105, %p106
      %p108 = scmp.ne.s32.totalorder %s94, %s95
      %p109 = scmp.eq.s32.totalorder %s19, 2
      %p110 = por %p108, %p109
      %p112 = scmp.ne.s32.totalorder %s95, %s111
      %p113 = scmp.eq.s32.totalorder %s19, 0
      %p114 = por %p112, %p113
      %s116 = sadd.s32 %s115, 1
      %p119 = scmp.eq.s32.totalorder %s13, 2
      %p120 = scmp.ne.s32.totalorder %s115, %s117
      %p121 = scmp.eq.s32.totalorder %s13, 0
      %p122 = por %p120, %p121
      %p123 = scmp.ne.s32.totalorder %s115, %s117
      %p124 = scmp.eq.s32.totalorder %s18, 2
      %p125 = por %p123, %p124
      %p126 = scmp.ne.s32.totalorder %s117, %s118
      %p127 = scmp.eq.s32.totalorder %s18, 0
      %p128 = por %p126, %p127
      %p129 = scmp.ne.s32.totalorder %s117, %s118
      %p130 = scmp.eq.s32.totalorder %s19, 2
      %p131 = por %p129, %p130
      %p133 = scmp.ne.s32.totalorder %s118, %s132
      %p134 = scmp.eq.s32.totalorder %s19, 0
      %p135 = por %p133, %p134
      %p136 = scmp.le.s32.totalorder 1, %s13
      %p137 = scmp.lt.s32.totalorder %s13, 4
      %p138 = pnand %p136, %p137
      %p139 = pneg %p138
      // Predicated region
      $region9: #{tpu_custom_call.1} parent=5 // pred_check
        _
      $region10: #{tpu_custom_call.1} parent=5 // pred_check_branch
        %141 = sbr.rel (%p138) target = $region12
      $region11: #{tpu_custom_call.1} parent=5 // pred_region
        %s142 = ssub.s32 %s13, 1
        // Predicated region
        $region13: #{tpu_custom_call.1} parent=11 // pred_check
          %p143 = pneg %p34
        $region14: #{tpu_custom_call.1} parent=11 // pred_check_branch
          %145 = sbr.rel (%p143) target = $region16
        $region15: #{tpu_custom_call.1} parent=11 // pred_region
          %s147 = ssub.s32 1024, 1024
          %148 = vsyncadd [#allocation4], %s147
          %s149 = sshll.u32 [#allocation3], 4
          %s150 = int_to_ptr.vmem [resolvable:$true] %s149
          %155 = dma.hbm_to_vmem [thread:$0]  %s0, 1024, %s150, [#allocation4], 64, 64, 4
        $region16: #{tpu_custom_call.1} parent=11 // pred_fallthru
          _
        // Predicated region
        $region17: #{tpu_custom_call.1} parent=11 // pred_check
          %p156 = pneg %p55
        $region18: #{tpu_custom_call.1} parent=11 // pred_check_branch
          %158 = sbr.rel (%p156) target = $region20
        $region19: #{tpu_custom_call.1} parent=11 // pred_region
          %s160 = ssub.s32 1024, 1024
          %161 = vsyncadd [#allocation7], %s160
          %s162 = sshll.u32 [#allocation6], 4
          %s163 = int_to_ptr.vmem [resolvable:$true] %s162
          %168 = dma.hbm_to_vmem [thread:$0]  %s1, 1024, %s163, [#allocation7], 64, 64, 4
        $region20: #{tpu_custom_call.1} parent=11 // pred_fallthru
          _
      $region12: #{tpu_custom_call.1} parent=5 // pred_fallthru
        _
      %p169 = scmp.lt.s32.totalorder %s13, 3
      // Predicated region
      $region21: #{tpu_custom_call.1} parent=5 // pred_check
        %p170 = pneg %p169
      $region22: #{tpu_custom_call.1} parent=5 // pred_check_branch
        %172 = sbr.rel (%p170) target = $region24
      $region23: #{tpu_custom_call.1} parent=5 // pred_region
        // Predicated region
        $region25: #{tpu_custom_call.1} parent=23 // pred_check
          %p173 = pneg %p75
        $region26: #{tpu_custom_call.1} parent=23 // pred_check_branch
          %175 = sbr.rel (%p173) target = $region28
        $region27: #{tpu_custom_call.1} parent=23 // pred_region
          %s176 = sand.u32 %s13, 1
          %s177 = scalar_lea.sflag [#allocation4], %s176
          %s178 = sand.u32 %s65, 1
          %s179 = smul.addr %s178, 64
          %s180 = scalar_lea.vmem [#allocation8], %s179
          %s182 = ssub.s32 1024, 1024
          %183 = vsyncadd %s177, %s182
          %s184 = smul.addr %s13, 16
          %s185 = smul.addr %s184, 64
          %s186 = scalar_lea.hbm %s2, %s185
          %s187 = sshll.u32 %s180, 4
          %s188 = int_to_ptr.vmem [resolvable:$true] %s187
          %193 = dma.hbm_to_vmem [thread:$0]  %s186, 1024, %s188, %s177, 64, 64, 4
        $region28: #{tpu_custom_call.1} parent=23 // pred_fallthru
          _
        // Predicated region
        $region29: #{tpu_custom_call.1} parent=23 // pred_check
          %p194 = pneg %p101
        $region30: #{tpu_custom_call.1} parent=23 // pred_check_branch
          %196 = sbr.rel (%p194) target = $region32
        $region31: #{tpu_custom_call.1} parent=23 // pred_region
          %p197 = scmp.lt.s32.totalorder %s13, 2
          %s198 = scalar_select %p197, %s13, 2
          %s199 = scalar_lea.vmem %s3, %s198
        $region32: #{tpu_custom_call.1} parent=23 // pred_fallthru
          _
      $region24: #{tpu_custom_call.1} parent=5 // pred_fallthru
        _
      %p200 = scmp.le.s32.totalorder 1, %s13
      %p201 = scmp.lt.s32.totalorder %s13, 4
      %p202 = pnand %p200, %p201
      %p203 = pneg %p202
      // Predicated region
      $region33: #{tpu_custom_call.1} parent=5 // pred_check
        _
      $region34: #{tpu_custom_call.1} parent=5 // pred_check_branch
        %205 = sbr.rel (%p202) target = $region36
      $region35: #{tpu_custom_call.1} parent=5 // pred_region
        %s206 = ssub.s32 %s13, 1
        // Predicated region
        $region37: #{tpu_custom_call.1} parent=35 // pred_check
          %p207 = pneg %p34
        $region38: #{tpu_custom_call.1} parent=35 // pred_check_branch
          %209 = sbr.rel (%p207) target = $region40
        $region39: #{tpu_custom_call.1} parent=35 // pred_region
          %210 = dma.done [#allocation4], 1024
        $region40: #{tpu_custom_call.1} parent=35 // pred_fallthru
          _
        // Predicated region
        $region41: #{tpu_custom_call.1} parent=35 // pred_check
          %p211 = pneg %p55
        $region42: #{tpu_custom_call.1} parent=35 // pred_check_branch
          %213 = sbr.rel (%p211) target = $region44
        $region43: #{tpu_custom_call.1} parent=35 // pred_region
          %214 = dma.done [#allocation7], 1024
        $region44: #{tpu_custom_call.1} parent=35 // pred_fallthru
          _
        %s215 = sand.u32 %s18, 1
        %s216 = scalar_lea.sflag [#allocation4], %s215
        %s217 = sand.u32 %s68, 1
        %s218 = smul.addr %s217, 64
        %s219 = scalar_lea.vmem [#allocation8], %s218
        // Predicated region
        $region45: #{tpu_custom_call.1} parent=35 // pred_check
          %p220 = pneg %p81
        $region46: #{tpu_custom_call.1} parent=35 // pred_check_branch
          %222 = sbr.rel (%p220) target = $region48
        $region47: #{tpu_custom_call.1} parent=35 // pred_region
          %223 = dma.done %s216, 1024
        $region48: #{tpu_custom_call.1} parent=35 // pred_fallthru
          _
        %p224 = pneg %p34
        %p225 = pneg %p31
        %p226 = pneg %p55
        %p227 = pneg %p52
        %s228 = sand.u32 %s18, 1
        %s229 = scalar_lea.sflag [#allocation4], %s228
        %s230 = sand.u32 %s68, 1
        %s231 = smul.addr %s230, 64
        %s232 = scalar_lea.vmem [#allocation8], %s231
        %p233 = pneg %p81
        %p234 = pneg %p78
        %p235 = scmp.lt.s32.totalorder %s18, 2
        %s236 = scalar_select %p235, %s18, 2
        %s237 = scalar_lea.vmem %s3, %s236
        %p238 = pneg %p107
        %p239 = pneg %p104
        %p240 = pneg %p128
        %p241 = pneg %p125
        %p242 = scmp.lt.s32.totalorder %s18, 2
        %s243 = scalar_select %p242, %s18, 2
        %s244 = scalar_lea.vmem %s3, %s243
        %p246 = scmp.eq.s32.totalorder %s18, 0
        // Predicated region
        $region49: #{tpu_custom_call.1} parent=35 // pred_check
          %p247 = pneg %p246
        $region50: #{tpu_custom_call.1} parent=35 // pred_check_branch
          %249 = sbr.rel (%p247) target = $region52
        $region51: #{tpu_custom_call.1} parent=35 // pred_region
          %v250 = vld [vmem:[#allocation6] sm:$0xf]
          %v251 = vld [vmem:[#allocation6 + $0x4] sm:$0xf]
          %v252 = vld [vmem:[#allocation6 + $0x8] sm:$0xf]
          %v253 = vld [vmem:[#allocation6 + $0xc] sm:$0xf]
          %v254 = vld [vmem:[#allocation6 + $0x10] sm:$0xf]
          %v255 = vld [vmem:[#allocation6 + $0x14] sm:$0xf]
          %v256 = vld [vmem:[#allocation6 + $0x18] sm:$0xf]
          %v257 = vld [vmem:[#allocation6 + $0x1c] sm:$0xf]
          %v258 = vld [vmem:[#allocation6 + $0x20] sm:$0xf]
          %v259 = vld [vmem:[#allocation6 + $0x24] sm:$0xf]
          %v260 = vld [vmem:[#allocation6 + $0x28] sm:$0xf]
          %v261 = vld [vmem:[#allocation6 + $0x2c] sm:$0xf]
          %v262 = vld [vmem:[#allocation6 + $0x30] sm:$0xf]
          %v263 = vld [vmem:[#allocation6 + $0x34] sm:$0xf]
          %v264 = vld [vmem:[#allocation6 + $0x38] sm:$0xf]
          %v265 = vld [vmem:[#allocation6 + $0x3c] sm:$0xf]
          %266 = vst [vmem:[#allocation2] sm:$0xf] %v250
          %267 = vst [vmem:[#allocation2 + $0x4] sm:$0xf] %v251
          %268 = vst [vmem:[#allocation2 + $0x8] sm:$0xf] %v252
          %269 = vst [vmem:[#allocation2 + $0xc] sm:$0xf] %v253
          %270 = vst [vmem:[#allocation2 + $0x10] sm:$0xf] %v254
          %271 = vst [vmem:[#allocation2 + $0x14] sm:$0xf] %v255
          %272 = vst [vmem:[#allocation2 + $0x18] sm:$0xf] %v256
          %273 = vst [vmem:[#allocation2 + $0x1c] sm:$0xf] %v257
          %274 = vst [vmem:[#allocation2 + $0x20] sm:$0xf] %v258
          %275 = vst [vmem:[#allocation2 + $0x24] sm:$0xf] %v259
          %276 = vst [vmem:[#allocation2 + $0x28] sm:$0xf] %v260
          %277 = vst [vmem:[#allocation2 + $0x2c] sm:$0xf] %v261
          %278 = vst [vmem:[#allocation2 + $0x30] sm:$0xf] %v262
          %279 = vst [vmem:[#allocation2 + $0x34] sm:$0xf] %v263
          %280 = vst [vmem:[#allocation2 + $0x38] sm:$0xf] %v264
          %281 = vst [vmem:[#allocation2 + $0x3c] sm:$0xf] %v265
        $region52: #{tpu_custom_call.1} parent=35 // pred_fallthru
          _
        %v282 = vld [vmem:[#allocation2] sm:$0xf]
        %v283 = vld [vmem:[#allocation2 + $0x4] sm:$0xf]
        %v284 = vld [vmem:[#allocation2 + $0x8] sm:$0xf]
        %v285 = vld [vmem:[#allocation2 + $0xc] sm:$0xf]
        %v286 = vld [vmem:[#allocation2 + $0x10] sm:$0xf]
        %v287 = vld [vmem:[#allocation2 + $0x14] sm:$0xf]
        %v288 = vld [vmem:[#allocation2 + $0x18] sm:$0xf]
        %v289 = vld [vmem:[#allocation2 + $0x1c] sm:$0xf]
        %v290 = vld [vmem:[#allocation2 + $0x20] sm:$0xf]
        %v291 = vld [vmem:[#allocation2 + $0x24] sm:$0xf]
        %v292 = vld [vmem:[#allocation2 + $0x28] sm:$0xf]
        %v293 = vld [vmem:[#allocation2 + $0x2c] sm:$0xf]
        %v294 = vld [vmem:[#allocation2 + $0x30] sm:$0xf]
        %v295 = vld [vmem:[#allocation2 + $0x34] sm:$0xf]
        %v296 = vld [vmem:[#allocation2 + $0x38] sm:$0xf]
        %v297 = vld [vmem:[#allocation2 + $0x3c] sm:$0xf]
        %v298 = vld [vmem:[%s219] sm:$0xf]
        %v299 = vld [vmem:[%s219 + $0x4] sm:$0xf]
        %v300 = vld [vmem:[%s219 + $0x8] sm:$0xf]
        %v301 = vld [vmem:[%s219 + $0xc] sm:$0xf]
        %v302 = vld [vmem:[%s219 + $0x10] sm:$0xf]
        %v303 = vld [vmem:[%s219 + $0x14] sm:$0xf]
        %v304 = vld [vmem:[%s219 + $0x18] sm:$0xf]
        %v305 = vld [vmem:[%s219 + $0x1c] sm:$0xf]
        %v306 = vld [vmem:[%s219 + $0x20] sm:$0xf]
        %v307 = vld [vmem:[%s219 + $0x24] sm:$0xf]
        %v308 = vld [vmem:[%s219 + $0x28] sm:$0xf]
        %v309 = vld [vmem:[%s219 + $0x2c] sm:$0xf]
        %v310 = vld [vmem:[%s219 + $0x30] sm:$0xf]
        %v311 = vld [vmem:[%s219 + $0x34] sm:$0xf]
        %v312 = vld [vmem:[%s219 + $0x38] sm:$0xf]
        %v313 = vld [vmem:[%s219 + $0x3c] sm:$0xf]
        %v330 = vunpack.c.l.b16 %v282
        %v331 = vunpack.c.l.b16 %v283
        %v332 = vunpack.c.l.b16 %v284
        %v333 = vunpack.c.l.b16 %v285
        %v334 = vunpack.c.l.b16 %v286
        %v335 = vunpack.c.l.b16 %v287
        %v336 = vunpack.c.l.b16 %v288
        %v337 = vunpack.c.l.b16 %v289
        %v338 = vunpack.c.l.b16 %v290
        %v339 = vunpack.c.l.b16 %v291
        %v340 = vunpack.c.l.b16 %v292
        %v341 = vunpack.c.l.b16 %v293
        %v342 = vunpack.c.l.b16 %v294
        %v343 = vunpack.c.l.b16 %v295
        %v344 = vunpack.c.l.b16 %v296
        %v345 = vunpack.c.l.b16 %v297
        %v346 = vpack.c.b16 %v331, %v330
        %v347 = vpack.c.b16 %v333, %v332
        %v348 = vpack.c.b16 %v335, %v334
        %v349 = vpack.c.b16 %v337, %v336
        %v350 = vpack.c.b16 %v339, %v338
        %v351 = vpack.c.b16 %v341, %v340
        %v352 = vpack.c.b16 %v343, %v342
        %v353 = vpack.c.b16 %v345, %v344
        %v378 = vunpack.c.l.b16 %v298
        %v379 = vunpack.c.l.b16 %v299
        %v380 = vunpack.c.l.b16 %v300
        %v381 = vunpack.c.l.b16 %v301
        %v382 = vunpack.c.l.b16 %v302
        %v383 = vunpack.c.l.b16 %v303
        %v384 = vunpack.c.l.b16 %v304
        %v385 = vunpack.c.l.b16 %v305
        %v386 = vunpack.c.l.b16 %v306
        %v387 = vunpack.c.l.b16 %v307
        %v388 = vunpack.c.l.b16 %v308
        %v389 = vunpack.c.l.b16 %v309
        %v390 = vunpack.c.l.b16 %v310
        %v391 = vunpack.c.l.b16 %v311
        %v392 = vunpack.c.l.b16 %v312
        %v393 = vunpack.c.l.b16 %v313
        %v394 = vpack.c.b16 %v379, %v378
        %v395 = vpack.c.b16 %v381, %v380
        %v396 = vpack.c.b16 %v383, %v382
        %v397 = vpack.c.b16 %v385, %v384
        %v398 = vpack.c.b16 %v387, %v386
        %v399 = vpack.c.b16 %v389, %v388
        %v400 = vpack.c.b16 %v391, %v390
        %v401 = vpack.c.b16 %v393, %v392
        %410 = vmatprep.subr.bf16.mxu0 0
        %411 = vmatpush1.bf16.msra.mxu0 %v401
        %412 = vmatprep.subr.bf16.mxu0 0
        %413 = vmatpush1.bf16.msra.mxu0 %v400
        %414 = vmatprep.subr.bf16.mxu0 0
        %415 = vmatpush1.bf16.msra.mxu0 %v399
        %416 = vmatprep.subr.bf16.mxu0 0
        %417 = vmatpush1.bf16.msra.mxu0 %v398
        %418 = vmatprep.subr.bf16.mxu0 0
        %419 = vmatpush1.bf16.msra.mxu0 %v397
        %420 = vmatprep.subr.bf16.mxu0 0
        %421 = vmatpush1.bf16.msra.mxu0 %v396
        %422 = vmatprep.subr.bf16.mxu0 0
        %423 = vmatpush1.bf16.msra.mxu0 %v395
        %424 = vmatprep.subr.bf16.mxu0 0
        %425 = vmatpush1.bf16.msra.mxu0 %v394
        %426 = vmatprep.subr.bf16.mxu0 0
        %427 = vmatpush2.bf16.msra.mxu0 0
        %428 = vmatprep.subr.bf16.mxu0 0
        %429 = vmatpush2.bf16.msra.mxu0 0
        %430 = vmatprep.subr.bf16.mxu0 0
        %431 = vmatpush2.bf16.msra.mxu0 0
        %432 = vmatprep.subr.bf16.mxu0 0
        %433 = vmatpush2.bf16.msra.mxu0 0
        %434 = vmatprep.subr.bf16.mxu0 0
        %435 = vmatpush2.bf16.msra.mxu0 0
        %436 = vmatprep.subr.bf16.mxu0 0
        %437 = vmatpush2.bf16.msra.mxu0 0
        %438 = vmatprep.subr.bf16.mxu0 0
        %439 = vmatpush2.bf16.msra.mxu0 0
        %440 = vmatprep.subr.bf16.mxu0 0
        %441 = vmatpush2.bf16.msra.mxu0 0
        %442 = vmatprep.mubr.bf16.mxu0 0
        %443 = vmatmul.mubr.bf16.gmra.mxu0 %v346
        %v444 = vpop.f32.mrf.mxu0
        %v445 = vadd.f32 0.0, %v444
        %v446 = vpop.f32.mrf.mxu0
        %v447 = vpop.f32.mrf.mxu0
        %v448 = vadd.f32 0.0, %v447
        %v449 = vpop.f32.mrf.mxu0
        %450 = vmatprep.mubr.bf16.mxu0 0
        %451 = vmatmul.mubr.bf16.gmra.mxu0 %v347
        %v452 = vpop.f32.mrf.mxu0
        %v453 = vadd.f32 0.0, %v452
        %v454 = vpop.f32.mrf.mxu0
        %v455 = vpop.f32.mrf.mxu0
        %v456 = vadd.f32 0.0, %v455
        %v457 = vpop.f32.mrf.mxu0
        %458 = vmatprep.mubr.bf16.mxu0 0
        %459 = vmatmul.mubr.bf16.gmra.mxu0 %v348
        %v460 = vpop.f32.mrf.mxu0
        %v461 = vadd.f32 0.0, %v460
        %v462 = vpop.f32.mrf.mxu0
        %v463 = vpop.f32.mrf.mxu0
        %v464 = vadd.f32 0.0, %v463
        %v465 = vpop.f32.mrf.mxu0
        %466 = vmatprep.mubr.bf16.mxu0 0
        %467 = vmatmul.mubr.bf16.gmra.mxu0 %v349
        %v468 = vpop.f32.mrf.mxu0
        %v469 = vadd.f32 0.0, %v468
        %v470 = vpop.f32.mrf.mxu0
        %v471 = vpop.f32.mrf.mxu0
        %v472 = vadd.f32 0.0, %v471
        %v473 = vpop.f32.mrf.mxu0
        %474 = vmatprep.mubr.bf16.mxu0 0
        %475 = vmatmul.mubr.bf16.gmra.mxu0 %v350
        %v476 = vpop.f32.mrf.mxu0
        %v477 = vadd.f32 0.0, %v476
        %v478 = vpop.f32.mrf.mxu0
        %v479 = vpop.f32.mrf.mxu0
        %v480 = vadd.f32 0.0, %v479
        %v481 = vpop.f32.mrf.mxu0
        %482 = vmatprep.mubr.bf16.mxu0 0
        %483 = vmatmul.mubr.bf16.gmra.mxu0 %v351
        %v484 = vpop.f32.mrf.mxu0
        %v485 = vadd.f32 0.0, %v484
        %v486 = vpop.f32.mrf.mxu0
        %v487 = vpop.f32.mrf.mxu0
        %v488 = vadd.f32 0.0, %v487
        %v489 = vpop.f32.mrf.mxu0
        %490 = vmatprep.mubr.bf16.mxu0 0
        %491 = vmatmul.mubr.bf16.gmra.mxu0 %v352
        %v492 = vpop.f32.mrf.mxu0
        %v493 = vadd.f32 0.0, %v492
        %v494 = vpop.f32.mrf.mxu0
        %v495 = vpop.f32.mrf.mxu0
        %v496 = vadd.f32 0.0, %v495
        %v497 = vpop.f32.mrf.mxu0
        %498 = vmatprep.mubr.bf16.mxu0 0
        %499 = vmatmul.mubr.bf16.gmra.mxu0 %v353
        %v500 = vpop.f32.mrf.mxu0
        %v501 = vadd.f32 0.0, %v500
        %v502 = vpop.f32.mrf.mxu0
        %v503 = vpop.f32.mrf.mxu0
        %v504 = vadd.f32 0.0, %v503
        %v505 = vpop.f32.mrf.mxu0
        %506 = vdwg.mxu0
        %v507 = vld [vmem:[#allocation3] sm:$0xf]
        %v508 = vld [vmem:[#allocation3 + $0x4] sm:$0xf]
        %v509 = vld [vmem:[#allocation3 + $0x8] sm:$0xf]
        %v510 = vld [vmem:[#allocation3 + $0xc] sm:$0xf]
        %v511 = vld [vmem:[#allocation3 + $0x10] sm:$0xf]
        %v512 = vld [vmem:[#allocation3 + $0x14] sm:$0xf]
        %v513 = vld [vmem:[#allocation3 + $0x18] sm:$0xf]
        %v514 = vld [vmem:[#allocation3 + $0x1c] sm:$0xf]
        %v515 = vld [vmem:[#allocation3 + $0x20] sm:$0xf]
        %v516 = vld [vmem:[#allocation3 + $0x24] sm:$0xf]
        %v517 = vld [vmem:[#allocation3 + $0x28] sm:$0xf]
        %v518 = vld [vmem:[#allocation3 + $0x2c] sm:$0xf]
        %v519 = vld [vmem:[#allocation3 + $0x30] sm:$0xf]
        %v520 = vld [vmem:[#allocation3 + $0x34] sm:$0xf]
        %v521 = vld [vmem:[#allocation3 + $0x38] sm:$0xf]
        %v522 = vld [vmem:[#allocation3 + $0x3c] sm:$0xf]
        %v523 = vpack.c.bf16 %v448, %v445
        %v524 = vpack.c.bf16 %v456, %v453
        %v525 = vpack.c.bf16 %v464, %v461
        %v526 = vpack.c.bf16 %v472, %v469
        %v527 = vpack.c.bf16 %v480, %v477
        %v528 = vpack.c.bf16 %v488, %v485
        %v529 = vpack.c.bf16 %v496, %v493
        %v530 = vpack.c.bf16 %v504, %v501
        %v531 = vld [vmem:[%s244] sm:$0x1]
        %v533 = vlaneseq
        %v534 = vshrl.u32 %v533, 7
        %v535 = vsub.s32 0, %v534
        %v536 = vrot.slane %v531, %v535
        %v554 = vunpack.c.l.b16 %v507
        %v555 = vunpack.c.l.b16 %v508
        %v556 = vunpack.c.l.b16 %v509
        %v557 = vunpack.c.l.b16 %v510
        %v558 = vunpack.c.l.b16 %v511
        %v559 = vunpack.c.l.b16 %v512
        %v560 = vunpack.c.l.b16 %v513
        %v561 = vunpack.c.l.b16 %v514
        %v562 = vunpack.c.l.b16 %v515
        %v563 = vunpack.c.l.b16 %v516
        %v564 = vunpack.c.l.b16 %v517
        %v565 = vunpack.c.l.b16 %v518
        %v566 = vunpack.c.l.b16 %v519
        %v567 = vunpack.c.l.b16 %v520
        %v568 = vunpack.c.l.b16 %v521
        %v569 = vunpack.c.l.b16 %v522
        %v570 = vpack.c.b16 %v555, %v554
        %v571 = vpack.c.b16 %v557, %v556
        %v572 = vpack.c.b16 %v559, %v558
        %v573 = vpack.c.b16 %v561, %v560
        %v574 = vpack.c.b16 %v563, %v562
        %v575 = vpack.c.b16 %v565, %v564
        %v576 = vpack.c.b16 %v567, %v566
        %v577 = vpack.c.b16 %v569, %v568
        %586 = vmatprep.subr.bf16.mxu0 0
        %587 = vmatpush1.bf16.msra.mxu0 %v530
        %588 = vmatprep.subr.bf16.mxu0 0
        %589 = vmatpush1.bf16.msra.mxu0 %v529
        %590 = vmatprep.subr.bf16.mxu0 0
        %591 = vmatpush1.bf16.msra.mxu0 %v528
        %592 = vmatprep.subr.bf16.mxu0 0
        %593 = vmatpush1.bf16.msra.mxu0 %v527
        %594 = vmatprep.subr.bf16.mxu0 0
        %595 = vmatpush1.bf16.msra.mxu0 %v526
        %596 = vmatprep.subr.bf16.mxu0 0
        %597 = vmatpush1.bf16.msra.mxu0 %v525
        %598 = vmatprep.subr.bf16.mxu0 0
        %599 = vmatpush1.bf16.msra.mxu0 %v524
        %600 = vmatprep.subr.bf16.mxu0 0
        %601 = vmatpush1.bf16.msra.mxu0 %v523
        %602 = vmatprep.subr.bf16.mxu0 0
        %603 = vmatpush2.bf16.msra.mxu0 0
        %604 = vmatprep.subr.bf16.mxu0 0
        %605 = vmatpush2.bf16.msra.mxu0 0
        %606 = vmatprep.subr.bf16.mxu0 0
        %607 = vmatpush2.bf16.msra.mxu0 0
        %608 = vmatprep.subr.bf16.mxu0 0
        %609 = vmatpush2.bf16.msra.mxu0 0
        %610 = vmatprep.subr.bf16.mxu0 0
        %611 = vmatpush2.bf16.msra.mxu0 0
        %612 = vmatprep.subr.bf16.mxu0 0
        %613 = vmatpush2.bf16.msra.mxu0 0
        %614 = vmatprep.subr.bf16.mxu0 0
        %615 = vmatpush2.bf16.msra.mxu0 0
        %616 = vmatprep.subr.bf16.mxu0 0
        %617 = vmatpush2.bf16.msra.mxu0 0
        %618 = vmatprep.mubr.bf16.mxu0 0
        %619 = vmatmul.mubr.bf16.gmra.mxu0 %v570
        %v620 = vpop.f32.mrf.mxu0
        %v621 = vadd.f32 %v536, %v620
        %v622 = vpop.f32.mrf.mxu0
        %v623 = vpop.f32.mrf.mxu0
        %v624 = vadd.f32 %v536, %v623
        %v625 = vpop.f32.mrf.mxu0
        %626 = vmatprep.mubr.bf16.mxu0 0
        %627 = vmatmul.mubr.bf16.gmra.mxu0 %v571
        %v628 = vpop.f32.mrf.mxu0
        %v629 = vadd.f32 %v536, %v628
        %v630 = vpop.f32.mrf.mxu0
        %v631 = vpop.f32.mrf.mxu0
        %v632 = vadd.f32 %v536, %v631
        %v633 = vpop.f32.mrf.mxu0
        %634 = vmatprep.mubr.bf16.mxu0 0
        %635 = vmatmul.mubr.bf16.gmra.mxu0 %v572
        %v636 = vpop.f32.mrf.mxu0
        %v637 = vadd.f32 %v536, %v636
        %v638 = vpop.f32.mrf.mxu0
        %v639 = vpop.f32.mrf.mxu0
        %v640 = vadd.f32 %v536, %v639
        %v641 = vpop.f32.mrf.mxu0
        %642 = vmatprep.mubr.bf16.mxu0 0
        %643 = vmatmul.mubr.bf16.gmra.mxu0 %v573
        %v644 = vpop.f32.mrf.mxu0
        %v645 = vadd.f32 %v536, %v644
        %v646 = vpop.f32.mrf.mxu0
        %v647 = vpop.f32.mrf.mxu0
        %v648 = vadd.f32 %v536, %v647
        %v649 = vpop.f32.mrf.mxu0
        %650 = vmatprep.mubr.bf16.mxu0 0
        %651 = vmatmul.mubr.bf16.gmra.mxu0 %v574
        %v652 = vpop.f32.mrf.mxu0
        %v653 = vadd.f32 %v536, %v652
        %v654 = vpop.f32.mrf.mxu0
        %v655 = vpop.f32.mrf.mxu0
        %v656 = vadd.f32 %v536, %v655
        %v657 = vpop.f32.mrf.mxu0
        %658 = vmatprep.mubr.bf16.mxu0 0
        %659 = vmatmul.mubr.bf16.gmra.mxu0 %v575
        %v660 = vpop.f32.mrf.mxu0
        %v661 = vadd.f32 %v536, %v660
        %v662 = vpop.f32.mrf.mxu0
        %v663 = vpop.f32.mrf.mxu0
        %v664 = vadd.f32 %v536, %v663
        %v665 = vpop.f32.mrf.mxu0
        %666 = vmatprep.mubr.bf16.mxu0 0
        %667 = vmatmul.mubr.bf16.gmra.mxu0 %v576
        %v668 = vpop.f32.mrf.mxu0
        %v669 = vadd.f32 %v536, %v668
        %v670 = vpop.f32.mrf.mxu0
        %v671 = vpop.f32.mrf.mxu0
        %v672 = vadd.f32 %v536, %v671
        %v673 = vpop.f32.mrf.mxu0
        %674 = vmatprep.mubr.bf16.mxu0 0
        %675 = vmatmul.mubr.bf16.gmra.mxu0 %v577
        %v676 = vpop.f32.mrf.mxu0
        %v677 = vadd.f32 %v536, %v676
        %v678 = vpop.f32.mrf.mxu0
        %v679 = vpop.f32.mrf.mxu0
        %v680 = vadd.f32 %v536, %v679
        %v681 = vpop.f32.mrf.mxu0
        %682 = vdwg.mxu0
        %p683 = scmp.lt.s32.totalorder %s18, 2
        // Predicated region
        $region53: #{tpu_custom_call.1} parent=35 // pred_check
          %p684 = pneg %p683
        $region54: #{tpu_custom_call.1} parent=35 // pred_check_branch
          %686 = sbr.rel (%p684) target = $region56
        $region55: #{tpu_custom_call.1} parent=35 // pred_region
          %v687 = vmax.f32 %v621, 0.0
          %v688 = vmax.f32 %v624, 0.0
          %v689 = vmax.f32 %v629, 0.0
          %v690 = vmax.f32 %v632, 0.0
          %v691 = vmax.f32 %v637, 0.0
          %v692 = vmax.f32 %v640, 0.0
          %v693 = vmax.f32 %v645, 0.0
          %v694 = vmax.f32 %v648, 0.0
          %v695 = vmax.f32 %v653, 0.0
          %v696 = vmax.f32 %v656, 0.0
          %v697 = vmax.f32 %v661, 0.0
          %v698 = vmax.f32 %v664, 0.0
          %v699 = vmax.f32 %v669, 0.0
          %v700 = vmax.f32 %v672, 0.0
          %v701 = vmax.f32 %v677, 0.0
          %v702 = vmax.f32 %v680, 0.0
          %v703 = vpack.c.bf16 %v688, %v687
          %v704 = vpack.c.bf16 %v690, %v689
          %v705 = vpack.c.bf16 %v692, %v691
          %v706 = vpack.c.bf16 %v694, %v693
          %v707 = vpack.c.bf16 %v696, %v695
          %v708 = vpack.c.bf16 %v698, %v697
          %v709 = vpack.c.bf16 %v700, %v699
          %v710 = vpack.c.bf16 %v702, %v701
          %v719 = vunpack.c.l.b16 %v703
          %v720 = vunpack.c.h.b16 %v703
          %v721 = vunpack.c.l.b16 %v704
          %v722 = vunpack.c.h.b16 %v704
          %v723 = vunpack.c.l.b16 %v705
          %v724 = vunpack.c.h.b16 %v705
          %v725 = vunpack.c.l.b16 %v706
          %v726 = vunpack.c.h.b16 %v706
          %v727 = vunpack.c.l.b16 %v707
          %v728 = vunpack.c.h.b16 %v707
          %v729 = vunpack.c.l.b16 %v708
          %v730 = vunpack.c.h.b16 %v708
          %v731 = vunpack.c.l.b16 %v709
          %v732 = vunpack.c.h.b16 %v709
          %v733 = vunpack.c.l.b16 %v710
          %v734 = vunpack.c.h.b16 %v710
          %v735 = vpack.c.b16 %v719, %v719
          %v736 = vpack.c.b16 %v720, %v720
          %v737 = vpack.c.b16 %v721, %v721
          %v738 = vpack.c.b16 %v722, %v722
          %v739 = vpack.c.b16 %v723, %v723
          %v740 = vpack.c.b16 %v724, %v724
          %v741 = vpack.c.b16 %v725, %v725
          %v742 = vpack.c.b16 %v726, %v726
          %v743 = vpack.c.b16 %v727, %v727
          %v744 = vpack.c.b16 %v728, %v728
          %v745 = vpack.c.b16 %v729, %v729
          %v746 = vpack.c.b16 %v730, %v730
          %v747 = vpack.c.b16 %v731, %v731
          %v748 = vpack.c.b16 %v732, %v732
          %v749 = vpack.c.b16 %v733, %v733
          %v750 = vpack.c.b16 %v734, %v734
          %767 = vst [vmem:[#allocation2] sm:$0xf] %v735
          %768 = vst [vmem:[#allocation2 + $0x4] sm:$0xf] %v736
          %769 = vst [vmem:[#allocation2 + $0x8] sm:$0xf] %v737
          %770 = vst [vmem:[#allocation2 + $0xc] sm:$0xf] %v738
          %771 = vst [vmem:[#allocation2 + $0x10] sm:$0xf] %v739
          %772 = vst [vmem:[#allocation2 + $0x14] sm:$0xf] %v740
          %773 = vst [vmem:[#allocation2 + $0x18] sm:$0xf] %v741
          %774 = vst [vmem:[#allocation2 + $0x1c] sm:$0xf] %v742
          %775 = vst [vmem:[#allocation2 + $0x20] sm:$0xf] %v743
          %776 = vst [vmem:[#allocation2 + $0x24] sm:$0xf] %v744
          %777 = vst [vmem:[#allocation2 + $0x28] sm:$0xf] %v745
          %778 = vst [vmem:[#allocation2 + $0x2c] sm:$0xf] %v746
          %779 = vst [vmem:[#allocation2 + $0x30] sm:$0xf] %v747
          %780 = vst [vmem:[#allocation2 + $0x34] sm:$0xf] %v748
          %781 = vst [vmem:[#allocation2 + $0x38] sm:$0xf] %v749
          %782 = vst [vmem:[#allocation2 + $0x3c] sm:$0xf] %v750
        $region56: #{tpu_custom_call.1} parent=35 // pred_fallthru
          _
        %p783 = scmp.eq.s32.totalorder %s18, 2
        // Predicated region
        $region57: #{tpu_custom_call.1} parent=35 // pred_check
          %p784 = pneg %p783
        $region58: #{tpu_custom_call.1} parent=35 // pred_check_branch
          %786 = sbr.rel (%p784) target = $region60
        $region59: #{tpu_custom_call.1} parent=35 // pred_region
          %787 = vst [vmem:[#allocation9] sm:$0xff] %v621
          %788 = vst [vmem:[#allocation9 + $0x8] sm:$0xff] %v624
          %789 = vst [vmem:[#allocation9 + $0x10] sm:$0xff] %v629
          %790 = vst [vmem:[#allocation9 + $0x18] sm:$0xff] %v632
          %791 = vst [vmem:[#allocation9 + $0x20] sm:$0xff] %v637
          %792 = vst [vmem:[#allocation9 + $0x28] sm:$0xff] %v640
          %793 = vst [vmem:[#allocation9 + $0x30] sm:$0xff] %v645
          %794 = vst [vmem:[#allocation9 + $0x38] sm:$0xff] %v648
          %795 = vst [vmem:[#allocation9 + $0x40] sm:$0xff] %v653
          %796 = vst [vmem:[#allocation9 + $0x48] sm:$0xff] %v656
          %797 = vst [vmem:[#allocation9 + $0x50] sm:$0xff] %v661
          %798 = vst [vmem:[#allocation9 + $0x58] sm:$0xff] %v664
          %799 = vst [vmem:[#allocation9 + $0x60] sm:$0xff] %v669
          %800 = vst [vmem:[#allocation9 + $0x68] sm:$0xff] %v672
          %801 = vst [vmem:[#allocation9 + $0x70] sm:$0xff] %v677
          %802 = vst [vmem:[#allocation9 + $0x78] sm:$0xff] %v680
        $region60: #{tpu_custom_call.1} parent=35 // pred_fallthru
          _
        // Predicated region
        $region61: #{tpu_custom_call.1} parent=35 // pred_check
          %p803 = pneg %p125
        $region62: #{tpu_custom_call.1} parent=35 // pred_check_branch
          %805 = sbr.rel (%p803) target = $region64
        $region63: #{tpu_custom_call.1} parent=35 // pred_region
          %s807 = ssub.s32 2048, 2048
          %808 = vsyncadd [#allocation5], %s807
          %s809 = sshll.u32 [#allocation9], 4
          %s810 = int_to_ptr.vmem [resolvable:$true] %s809
          %815 = dma.vmem_to_hbm [thread:$0]  %s810, 2048, %s4, [#allocation5], 128, 128, 8
        $region64: #{tpu_custom_call.1} parent=35 // pred_fallthru
          _
        // Predicated region
        $region65: #{tpu_custom_call.1} parent=35 // pred_check
          %p816 = pneg %p125
        $region66: #{tpu_custom_call.1} parent=35 // pred_check_branch
          %818 = sbr.rel (%p816) target = $region68
        $region67: #{tpu_custom_call.1} parent=35 // pred_region
          %819 = dma.done [#allocation5], 2048
        $region68: #{tpu_custom_call.1} parent=35 // pred_fallthru
          _
      $region36: #{tpu_custom_call.1} parent=5 // pred_fallthru
        _
      %p820 = scmp.le.s32.totalorder 2, %s13
      // Predicated region
      $region69: #{tpu_custom_call.1} parent=5 // pred_check
        %p821 = pneg %p820
      $region70: #{tpu_custom_call.1} parent=5 // pred_check_branch
        %823 = sbr.rel (%p821) target = $region72
      $region71: #{tpu_custom_call.1} parent=5 // pred_region
        %s824 = ssub.s32 %s13, 2
      $region72: #{tpu_custom_call.1} parent=5 // pred_fallthru
        _
    $region6: #{tpu_custom_call.1} parent=1 // loop_footer
      %s17 = sadd.s32 1, %s13
    $region7: #{tpu_custom_call.1} parent=1 // loop_footer_branch
      %12 = sbr.rel target = $region3
    $region8: #{tpu_custom_call.1} parent=1 // loop_exit
      _
    %825 = vsyncpa [#allocation4], 1
    %s826 = scalar_lea.sflag [#allocation4], 1
    %827 = vsyncpa %s826, 1
    %828 = vsyncpa [#allocation7], 1
    %829 = vsyncpa [#allocation5], 1
    %s830 = scalar_lea.sflag [#allocation5], 1
    %831 = vsyncpa %s830, 1

</llo_original>
